<compile_context>
chip_gen: v7x
topology: tpu7x:2x2x1
jax: 0.10.0
libtpu: 0.0.40
codegen_flags: <defaults>
</compile_context>

<pallas_src>
import jax
import jax.numpy as jnp
from jax.experimental import pallas as pl
from jax.experimental.pallas import tpu as pltpu

_LANE = 128     # last-dim tile multiple (vreg lane width)
_SUBLANE = 8    # second-to-last-dim tile multiple (vreg sublane width)


def _round_up(n, m):
    return (n + m - 1) // m * m


def _policy_kernel(x_ref, w1_ref, b1_ref, w2_ref, b2_ref, w3_ref, b3_ref, o_ref):
    """Fused 3-layer MLP on one (tb, in_size) batch tile.

    Weights are MXU operands (bf16 by default); accumulation, bias add and
    ReLU stay in f32 (v5e has no bf16 VALU path).
    """
    cdt = w1_ref.dtype                       # MXU operand dtype (f32 or bf16)
    x = x_ref[...].astype(cdt)

    h1 = jnp.dot(x, w1_ref[...], preferred_element_type=jnp.float32) + b1_ref[...]
    h1 = jnp.maximum(h1, 0.0)                                         # ReLU (f32)

    h2 = jnp.dot(h1.astype(cdt), w2_ref[...],
                 preferred_element_type=jnp.float32) + b2_ref[...]
    h2 = jnp.maximum(h2, 0.0)                                         # ReLU (f32)

    out = jnp.dot(h2.astype(cdt), w3_ref[...],
                  preferred_element_type=jnp.float32) + b3_ref[...]
    o_ref[...] = out.astype(o_ref.dtype)


def prepare_params(params, *, mxu_dtype=jnp.bfloat16):
    """One-time padding/cast of weights & biases (hoisted out of the hot path).

    Hidden/output feature dims are zero-padded to lane-dense multiples of 128;
    the input feature dim is left unpadded (full-array-dim BlockSpec exemption).
    Zero padding is semantics-preserving: padded W rows/cols and b entries are
    0 and ReLU(0)=0, so valid outputs are unchanged.
    """
    in_size, hid = params["w1"].shape
    out_size = params["w3"].shape[1]
    hp = _round_up(hid, _LANE)
    fo = _round_up(out_size, _LANE)
    f32 = jnp.float32

    w1 = jnp.zeros((in_size, hp), mxu_dtype).at[:, :hid].set(
        params["w1"].astype(mxu_dtype))
    b1 = jnp.zeros((1, hp), f32).at[:, :hid].set(
        params["b1"].astype(f32).reshape(1, hid))
    w2 = jnp.zeros((hp, hp), mxu_dtype).at[:hid, :hid].set(
        params["w2"].astype(mxu_dtype))
    b2 = jnp.zeros((1, hp), f32).at[:, :hid].set(
        params["b2"].astype(f32).reshape(1, hid))
    w3 = jnp.zeros((hp, fo), mxu_dtype).at[:hid, :out_size].set(
        params["w3"].astype(mxu_dtype))
    b3 = jnp.zeros((1, fo), f32).at[:, :out_size].set(
        params["b3"].astype(f32).reshape(1, out_size))

    return {"w1": w1, "b1": b1, "w2": w2, "b2": b2, "w3": w3, "b3": b3,
            "in_size": in_size, "hidden_size": hid, "output_size": out_size}


def policy_network_forward(x, prepared, *, batch_tile=512):
    """Forward pass of PolicyNetwork via one pallas_call.

    x:        (B, input_size) float32
    prepared: output of prepare_params() (pre-padded, pre-cast weights)
    returns:  (B, output_size) float32 logits
    """
    B, in_size = x.shape
    assert in_size == prepared["in_size"]
    out_size = prepared["output_size"]
    w1, b1 = prepared["w1"], prepared["b1"]
    w2, b2 = prepared["w2"], prepared["b2"]
    w3, b3 = prepared["w3"], prepared["b3"]
    hp = w2.shape[0]
    fo = w3.shape[1]

    # Batch tiling:
    #   large B  -> batch_tile-row tiles (amortizes ~0.35us per-grid-step
    #               overhead; weights stay VMEM-resident across steps),
    #   moderate -> split into 2 tiles so both v7x TensorCores get work,
    #   tiny B   -> single tile padded to 8 sublane rows.
    if B > batch_tile:
        tb = batch_tile
    elif B >= 2 * _SUBLANE:
        tb = _round_up(-(-B // 2), _SUBLANE)
    else:
        tb = _round_up(B, _SUBLANE)
    bp = _round_up(B, tb)
    n_b = bp // tb

    # Only the batch rows are (cheaply) padded; the feature dim streams as-is.
    xp = x if bp == B else jnp.pad(x, ((0, bp - B), (0, 0)))

    # Explicit specs. x/out tiled over the batch grid; weights/biases pinned to
    # block (0, 0) so they stay resident in VMEM for every grid step. x's last
    # dim and w1's leading dim use the full-array-dim exemption (no (8,128)
    # padding needed there).
    in_specs = [
        pl.BlockSpec((tb, in_size), lambda i: (i, 0)),   # x tile (unpadded K)
        pl.BlockSpec((in_size, hp), lambda i: (0, 0)),   # w1 (resident)
        pl.BlockSpec((1, hp), lambda i: (0, 0)),         # b1
        pl.BlockSpec((hp, hp), lambda i: (0, 0)),        # w2
        pl.BlockSpec((1, hp), lambda i: (0, 0)),         # b2
        pl.BlockSpec((hp, fo), lambda i: (0, 0)),        # w3
        pl.BlockSpec((1, fo), lambda i: (0, 0)),         # b3
    ]
    out_spec = pl.BlockSpec((tb, fo), lambda i: (i, 0))

    w_item = jnp.dtype(w1.dtype).itemsize
    cost = pl.CostEstimate(
        flops=2 * bp * (in_size * hp + hp * hp + hp * fo),
        transcendentals=0,
        bytes_accessed=(xp.size * 4
                        + (w1.size + w2.size + w3.size) * w_item
                        + (b1.size + b2.size + b3.size) * 4
                        + bp * fo * 4),
    )

    out_padded = pl.pallas_call(
        _policy_kernel,
        out_shape=jax.ShapeDtypeStruct((bp, fo), jnp.float32),
        grid=(n_b,),
        in_specs=in_specs,
        out_specs=out_spec,
        compiler_params=pltpu.CompilerParams(
            # Measured-neutral on single-TC v5e/v6e; required for TensorCore
            # sharding of the batch tiles on v7x (n_b >= 2 for moderate/large B).
            dimension_semantics=("parallel",),
        ),
        cost_estimate=cost,
    )(xp, w1, b1, w2, b2, w3, b3)

    # TODO(synk): if a downstream op consumes the logits on-device, fuse it or
    # consume out_padded directly to avoid this extra slice/copy.
    return out_padded[:B, :out_size]


def init_params(key, input_size, hidden_size, output_size):
    """Deterministic init mimicking nn.Linear default (uniform +/- 1/sqrt(fan_in))."""
    ks = jax.random.split(key, 6)

    def linear(kw, kb, fan_in, fan_out):
        bound = 1.0 / jnp.sqrt(fan_in)
        w = jax.random.uniform(kw, (fan_in, fan_out), jnp.float32, -bound, bound)
        b = jax.random.uniform(kb, (1, fan_out), jnp.float32, -bound, bound)
        return w, b

    w1, b1 = linear(ks[0], ks[1], input_size, hidden_size)
    w2, b2 = linear(ks[2], ks[3], hidden_size, hidden_size)
    w3, b3 = linear(ks[4], ks[5], hidden_size, output_size)
    return {"w1": w1, "b1": b1, "w2": w2, "b2": b2, "w3": w3, "b3": b3}


if __name__ == "__main__":
    input_size, hidden_size, output_size = 16, 32, 8
    batch = 2

    key = jax.random.PRNGKey(0)
    k_params, k_x = jax.random.split(key)

    params = init_params(k_params, input_size, hidden_size, output_size)
    x = jax.random.normal(k_x, (batch, input_size), jnp.float32)

    # One-time parameter preparation (padding + cast), outside the hot path.
    prepared_bf16 = prepare_params(params, mxu_dtype=jnp.bfloat16)  # production path
    prepared_f32 = prepare_params(params, mxu_dtype=jnp.float32)    # exact-math check only

    out_bf16 = jax.block_until_ready(policy_network_forward(x, prepared_bf16))
    out_f32 = jax.block_until_ready(policy_network_forward(x, prepared_f32))

    # Pure-JAX reference of the same math.
    ref = jnp.maximum(x @ params["w1"] + params["b1"], 0.0)
    ref = jnp.maximum(ref @ params["w2"] + params["b2"], 0.0)
    ref = ref @ params["w3"] + params["b3"]

    assert out_f32.shape == (batch, output_size)
    assert out_bf16.shape == (batch, output_size)
    assert jnp.allclose(out_f32, ref, atol=1e-5, rtol=1e-5)
    assert jnp.allclose(out_bf16, ref, atol=5e-2, rtol=5e-2)

    print("KERNEL_OK")
</pallas_src>

<mosaic_0001>
module attributes {stable_mosaic.version = 11 : i64} {
  func.func @_policy_kernel(%arg0: i32, %arg1: memref<8x16xf32, #tpu.memory_space<vmem>>, %arg2: memref<16x128xbf16, #tpu.memory_space<vmem>>, %arg3: memref<1x128xf32, #tpu.memory_space<vmem>>, %arg4: memref<128x128xbf16, #tpu.memory_space<vmem>>, %arg5: memref<1x128xf32, #tpu.memory_space<vmem>>, %arg6: memref<128x128xbf16, #tpu.memory_space<vmem>>, %arg7: memref<1x128xf32, #tpu.memory_space<vmem>>, %arg8: memref<8x128xf32, #tpu.memory_space<vmem>>) attributes {dimension_semantics = [#tpu.dimension_semantics<parallel>], iteration_bounds = array<i64: 1>, scalar_prefetch = 0 : i64, scratch_operands = 0 : i64, tpu.core_type = #tpu.core_type<tc>, window_params = [{transform_indices = @transform_0, window_bounds = array<i64: 8, 16>}, {pipeline_mode = #tpu.pipeline_mode<synchronous>, transform_indices = @transform_1, window_bounds = array<i64: 16, 128>}, {pipeline_mode = #tpu.pipeline_mode<synchronous>, transform_indices = @transform_2, window_bounds = array<i64: 1, 128>}, {pipeline_mode = #tpu.pipeline_mode<synchronous>, transform_indices = @transform_3, window_bounds = array<i64: 128, 128>}, {pipeline_mode = #tpu.pipeline_mode<synchronous>, transform_indices = @transform_4, window_bounds = array<i64: 1, 128>}, {pipeline_mode = #tpu.pipeline_mode<synchronous>, transform_indices = @transform_5, window_bounds = array<i64: 128, 128>}, {pipeline_mode = #tpu.pipeline_mode<synchronous>, transform_indices = @transform_6, window_bounds = array<i64: 1, 128>}, {transform_indices = @transform_7, window_bounds = array<i64: 8, 128>}]} {
    %c0 = arith.constant 0 : index
    %c0_0 = arith.constant 0 : index
    %0 = vector.load %arg1[%c0, %c0_0] : memref<8x16xf32, #tpu.memory_space<vmem>>, vector<8x16xf32>
    %1 = arith.truncf %0 : vector<8x16xf32> to vector<8x16xbf16>
    %c0_1 = arith.constant 0 : index
    %c0_2 = arith.constant 0 : index
    %2 = vector.load %arg2[%c0_1, %c0_2] : memref<16x128xbf16, #tpu.memory_space<vmem>>, vector<16x128xbf16>
    %cst = arith.constant dense<0.000000e+00> : vector<8x128xf32>
    %3 = tpu.matmul %1, %2, %cst {dimension_numbers = #tpu.dot_dimension_numbers<[1], [0], [0], [1], [0, 0, 1, 1], [], []>} : vector<8x16xbf16>, vector<16x128xbf16>, vector<8x128xf32> -> vector<8x128xf32>
    %c0_3 = arith.constant 0 : index
    %c0_4 = arith.constant 0 : index
    %4 = vector.load %arg3[%c0_3, %c0_4] : memref<1x128xf32, #tpu.memory_space<vmem>>, vector<1x128xf32>
    %5 = vector.broadcast %4 : vector<1x128xf32> to vector<8x128xf32>
    %6 = arith.addf %3, %5 : vector<8x128xf32>
    %cst_5 = arith.constant 0.000000e+00 : f32
    %7 = vector.broadcast %cst_5 : f32 to vector<8x128xf32>
    %8 = arith.maximumf %6, %7 : vector<8x128xf32>
    %9 = arith.truncf %8 : vector<8x128xf32> to vector<8x128xbf16>
    %c0_6 = arith.constant 0 : index
    %c0_7 = arith.constant 0 : index
    %10 = vector.load %arg4[%c0_6, %c0_7] : memref<128x128xbf16, #tpu.memory_space<vmem>>, vector<128x128xbf16>
    %cst_8 = arith.constant dense<0.000000e+00> : vector<8x128xf32>
    %11 = tpu.matmul %9, %10, %cst_8 {dimension_numbers = #tpu.dot_dimension_numbers<[1], [0], [0], [1], [0, 0, 1, 1], [], []>} : vector<8x128xbf16>, vector<128x128xbf16>, vector<8x128xf32> -> vector<8x128xf32>
    %c0_9 = arith.constant 0 : index
    %c0_10 = arith.constant 0 : index
    %12 = vector.load %arg5[%c0_9, %c0_10] : memref<1x128xf32, #tpu.memory_space<vmem>>, vector<1x128xf32>
    %13 = vector.broadcast %12 : vector<1x128xf32> to vector<8x128xf32>
    %14 = arith.addf %11, %13 : vector<8x128xf32>
    %cst_11 = arith.constant 0.000000e+00 : f32
    %15 = vector.broadcast %cst_11 : f32 to vector<8x128xf32>
    %16 = arith.maximumf %14, %15 : vector<8x128xf32>
    %17 = arith.truncf %16 : vector<8x128xf32> to vector<8x128xbf16>
    %c0_12 = arith.constant 0 : index
    %c0_13 = arith.constant 0 : index
    %18 = vector.load %arg6[%c0_12, %c0_13] : memref<128x128xbf16, #tpu.memory_space<vmem>>, vector<128x128xbf16>
    %cst_14 = arith.constant dense<0.000000e+00> : vector<8x128xf32>
    %19 = tpu.matmul %17, %18, %cst_14 {dimension_numbers = #tpu.dot_dimension_numbers<[1], [0], [0], [1], [0, 0, 1, 1], [], []>} : vector<8x128xbf16>, vector<128x128xbf16>, vector<8x128xf32> -> vector<8x128xf32>
    %c0_15 = arith.constant 0 : index
    %c0_16 = arith.constant 0 : index
    %20 = vector.load %arg7[%c0_15, %c0_16] : memref<1x128xf32, #tpu.memory_space<vmem>>, vector<1x128xf32>
    %21 = vector.broadcast %20 : vector<1x128xf32> to vector<8x128xf32>
    %22 = arith.addf %19, %21 : vector<8x128xf32>
    %c0_17 = arith.constant 0 : index
    %c0_18 = arith.constant 0 : index
    %23 = vector.load %arg8[%c0_17, %c0_18] : memref<8x128xf32, #tpu.memory_space<vmem>>, vector<8x128xf32>
    tpu.vector_store %arg8[%c0_17, %c0_18], %22 {strides = array<i32>} : memref<8x128xf32, #tpu.memory_space<vmem>>, vector<8x128xf32>,
    return
  }
  func.func @transform_0(%arg0: i32) -> (i32, i32) {
    %c0_i32 = arith.constant 0 : i32
    %c0_i32_0 = arith.constant 0 : i32
    return %arg0, %c0_i32 : i32, i32
  }
  func.func @transform_1(%arg0: i32) -> (i32, i32) {
    %c0_i32 = arith.constant 0 : i32
    %c0_i32_0 = arith.constant 0 : i32
    %c0_i32_1 = arith.constant 0 : i32
    return %c0_i32, %c0_i32_0 : i32, i32
  }
  func.func @transform_2(%arg0: i32) -> (i32, i32) {
    %c0_i32 = arith.constant 0 : i32
    %c0_i32_0 = arith.constant 0 : i32
    %c0_i32_1 = arith.constant 0 : i32
    return %c0_i32, %c0_i32_0 : i32, i32
  }
  func.func @transform_3(%arg0: i32) -> (i32, i32) {
    %c0_i32 = arith.constant 0 : i32
    %c0_i32_0 = arith.constant 0 : i32
    %c0_i32_1 = arith.constant 0 : i32
    return %c0_i32, %c0_i32_0 : i32, i32
  }
  func.func @transform_4(%arg0: i32) -> (i32, i32) {
    %c0_i32 = arith.constant 0 : i32
    %c0_i32_0 = arith.constant 0 : i32
    %c0_i32_1 = arith.constant 0 : i32
    return %c0_i32, %c0_i32_0 : i32, i32
  }
  func.func @transform_5(%arg0: i32) -> (i32, i32) {
    %c0_i32 = arith.constant 0 : i32
    %c0_i32_0 = arith.constant 0 : i32
    %c0_i32_1 = arith.constant 0 : i32
    return %c0_i32, %c0_i32_0 : i32, i32
  }
  func.func @transform_6(%arg0: i32) -> (i32, i32) {
    %c0_i32 = arith.constant 0 : i32
    %c0_i32_0 = arith.constant 0 : i32
    %c0_i32_1 = arith.constant 0 : i32
    return %c0_i32, %c0_i32_0 : i32, i32
  }
  func.func @transform_7(%arg0: i32) -> (i32, i32) {
    %c0_i32 = arith.constant 0 : i32
    %c0_i32_0 = arith.constant 0 : i32
    return %arg0, %c0_i32 : i32, i32
  }
}

</mosaic_0001>

<llo_original>
// kernel: tpu_custom_call.1
$region0: #{tpu_custom_call.1}
  #allocation0 [shape = 'u32[]', space=smem, size = 0x4, offset = 0x4, fixed_abs, tag = 'smem constant byte address 0x4 - core index']
  #allocation1 [shape = 'u32[144,128]{1,0:T(1,128)}', space=vmem, size = 0x12000, scoped, tag = 'internal scratch']
  %s0 = inlined_call_operand.hbm [shape: f32[8,16], index: 0, kind: input, shape index: {}]
  %s1 = inlined_call_operand.hbm [shape: bf16[16,128], index: 1, kind: input, shape index: {}]
  %s2 = inlined_call_operand.vmem [shape: f32[1,128], index: 2, kind: input, shape index: {}]
  %s3 = inlined_call_operand.hbm [shape: bf16[128,128], index: 3, kind: input, shape index: {}]
  %s4 = inlined_call_operand.vmem [shape: f32[1,128], index: 4, kind: input, shape index: {}]
  %s5 = inlined_call_operand.hbm [shape: bf16[128,128], index: 5, kind: input, shape index: {}]
  %s6 = inlined_call_operand.vmem [shape: f32[1,128], index: 6, kind: input, shape index: {}]
  %s7 = inlined_call_operand.hbm [shape: f32[8,128], index: 7, kind: output, shape index: {}]
  %s8 = sld [smem:[#allocation0]]
  $region54: #{tpu_custom_call.1} parent=0
    _
  %s10 = ssub.s32 1, %s8
  %s11 = scalar_select 0, %s10, %s8
  $region1: #{tpu_custom_call.1} parent=0
    #allocation2 [shape = 'u8[4096]{0}', space=vmem, size = 0x1000, scoped, tag = 'input window, operand 0, single buffered']
    #allocation3 [shape = 's32[1]{0}', space=sflag, size = 0x4, scoped, tag = 'scoped memory for tpu_custom_call.1']
    #allocation4 [shape = 's32[1]{0}', space=sflag, size = 0x4, scoped, tag = 'scoped memory for tpu_custom_call.1']
    #allocation5 [shape = 'u8[4096]{0}', space=vmem, size = 0x1000, scoped, tag = 'input window, operand 1, single buffered']
    #allocation6 [shape = 's32[1]{0}', space=sflag, size = 0x4, scoped, tag = 'scoped memory for tpu_custom_call.1']
    #allocation7 [shape = 'u8[32768]{0}', space=vmem, size = 0x8000, scoped, tag = 'input window, operand 3, single buffered']
    #allocation8 [shape = 'u8[32768]{0}', space=vmem, size = 0x8000, scoped, tag = 'input window, operand 5, single buffered']
    #allocation9 [shape = 's32[1]{0}', space=sflag, size = 0x4, scoped, tag = 'scoped memory for tpu_custom_call.1']
    #allocation10 [shape = 'u8[4096]{0}', space=vmem, size = 0x1000, scoped, tag = 'output window, operand 0, single buffered']
    %12 = vsyncpa [#allocation3], 0
    %13 = vsyncpa [#allocation6], 0
    %14 = vsyncpa [#allocation9], 0
    %15 = vsyncpa [#allocation4], 0
    // Predicated region
    $region2: #{tpu_custom_call.1} parent=1 // pred_check
      _
    $region3: #{tpu_custom_call.1} parent=1 // pred_check_branch
      %17 = sbr.rel (0) target = $region5
    $region4: #{tpu_custom_call.1} parent=1 // pred_region
      %s19 = ssub.s32 128, 128
      %20 = vsyncadd [#allocation3], %s19
      %s22 = sshll.u32 [#allocation2], 4
      %s23 = int_to_ptr.vmem [resolvable:$true] %s22
      %25 = dma.hbm_to_vmem [thread:$0]  %s0, 128, %s23, [#allocation3]
    $region5: #{tpu_custom_call.1} parent=1 // pred_fallthru
      _
    // Predicated region
    $region6: #{tpu_custom_call.1} parent=1 // pred_check
      _
    $region7: #{tpu_custom_call.1} parent=1 // pred_check_branch
      %27 = sbr.rel (0) target = $region9
    $region8: #{tpu_custom_call.1} parent=1 // pred_region
      %s29 = ssub.s32 128, 128
      %30 = vsyncadd [#allocation6], %s29
      %s31 = sshll.u32 [#allocation5], 4
      %s32 = int_to_ptr.vmem [resolvable:$true] %s31
      %37 = dma.hbm_to_vmem [thread:$0]  %s1, 128, %s32, [#allocation6], 64, 64, 4
    $region9: #{tpu_custom_call.1} parent=1 // pred_fallthru
      _
    // Predicated region
    $region10: #{tpu_custom_call.1} parent=1 // pred_check
      _
    $region11: #{tpu_custom_call.1} parent=1 // pred_check_branch
      %39 = sbr.rel (0) target = $region13
    $region12: #{tpu_custom_call.1} parent=1 // pred_region
      _
    $region13: #{tpu_custom_call.1} parent=1 // pred_fallthru
      _
    // Predicated region
    $region14: #{tpu_custom_call.1} parent=1 // pred_check
      _
    $region15: #{tpu_custom_call.1} parent=1 // pred_check_branch
      %41 = sbr.rel (0) target = $region17
    $region16: #{tpu_custom_call.1} parent=1 // pred_region
      %s43 = ssub.s32 1024, 1024
      %44 = vsyncadd [#allocation6], %s43
      %s45 = sshll.u32 [#allocation7], 4
      %s46 = int_to_ptr.vmem [resolvable:$true] %s45
      %51 = dma.hbm_to_vmem [thread:$0]  %s3, 1024, %s46, [#allocation6], 64, 64, 4
    $region17: #{tpu_custom_call.1} parent=1 // pred_fallthru
      _
    // Predicated region
    $region18: #{tpu_custom_call.1} parent=1 // pred_check
      _
    $region19: #{tpu_custom_call.1} parent=1 // pred_check_branch
      %53 = sbr.rel (0) target = $region21
    $region20: #{tpu_custom_call.1} parent=1 // pred_region
      _
    $region21: #{tpu_custom_call.1} parent=1 // pred_fallthru
      _
    // Predicated region
    $region22: #{tpu_custom_call.1} parent=1 // pred_check
      _
    $region23: #{tpu_custom_call.1} parent=1 // pred_check_branch
      %55 = sbr.rel (0) target = $region25
    $region24: #{tpu_custom_call.1} parent=1 // pred_region
      %s57 = ssub.s32 1024, 1024
      %58 = vsyncadd [#allocation9], %s57
      %s59 = sshll.u32 [#allocation8], 4
      %s60 = int_to_ptr.vmem [resolvable:$true] %s59
      %65 = dma.hbm_to_vmem [thread:$0]  %s5, 1024, %s60, [#allocation9], 64, 64, 4
    $region25: #{tpu_custom_call.1} parent=1 // pred_fallthru
      _
    // Predicated region
    $region26: #{tpu_custom_call.1} parent=1 // pred_check
      _
    $region27: #{tpu_custom_call.1} parent=1 // pred_check_branch
      %67 = sbr.rel (0) target = $region29
    $region28: #{tpu_custom_call.1} parent=1 // pred_region
      _
    $region29: #{tpu_custom_call.1} parent=1 // pred_fallthru
      _
    // Predicated region
    $region30: #{tpu_custom_call.1} parent=1 // pred_check
      _
    $region31: #{tpu_custom_call.1} parent=1 // pred_check_branch
      %69 = sbr.rel (0) target = $region33
    $region32: #{tpu_custom_call.1} parent=1 // pred_region
      %70 = dma.done [#allocation3], 128
    $region33: #{tpu_custom_call.1} parent=1 // pred_fallthru
      _
    // Predicated region
    $region34: #{tpu_custom_call.1} parent=1 // pred_check
      _
    $region35: #{tpu_custom_call.1} parent=1 // pred_check_branch
      %72 = sbr.rel (0) target = $region37
    $region36: #{tpu_custom_call.1} parent=1 // pred_region
      %73 = dma.done [#allocation6], 128
    $region37: #{tpu_custom_call.1} parent=1 // pred_fallthru
      _
    // Predicated region
    $region38: #{tpu_custom_call.1} parent=1 // pred_check
      _
    $region39: #{tpu_custom_call.1} parent=1 // pred_check_branch
      %75 = sbr.rel (0) target = $region41
    $region40: #{tpu_custom_call.1} parent=1 // pred_region
      %76 = dma.done [#allocation6], 1024
    $region41: #{tpu_custom_call.1} parent=1 // pred_fallthru
      _
    // Predicated region
    $region42: #{tpu_custom_call.1} parent=1 // pred_check
      _
    $region43: #{tpu_custom_call.1} parent=1 // pred_check_branch
      %78 = sbr.rel (0) target = $region45
    $region44: #{tpu_custom_call.1} parent=1 // pred_region
      %79 = dma.done [#allocation9], 1024
    $region45: #{tpu_custom_call.1} parent=1 // pred_fallthru
      _
    %v81 = vld [vmem:[#allocation2] sm:$0xff]
    %v82 = vpack.c.bf16 %v81, %v81
    %v83 = vld [vmem:[#allocation5] sm:$0xf]
    %v84 = vld [vmem:[#allocation5 + $0x4] sm:$0xf]
    %v85 = vld [vmem:[%s2] sm:$0x1]
    %v87 = vlaneseq
    %v88 = vshrl.u32 %v87, 7
    %v89 = vsub.s32 0, %v88
    %v90 = vrot.slane %v85, %v89
    %v94 = vunpack.c.l.b16 %v83
    %v95 = vunpack.c.l.b16 %v84
    %v96 = vpack.c.b16 %v95, %v94
    %vm98 = vcmask 130048
    %v100 = vsel %vm98, %v82, 0
    %102 = vmatprep.subr.bf16.mxu0 0
    %103 = vmatpush1.bf16.msra.mxu0 %v96
    %104 = vmatprep.subr.bf16.mxu0 0
    %105 = vmatpush1.bf16.msra.mxu0 0
    %106 = vmatprep.subr.bf16.mxu0 0
    %107 = vmatpush1.bf16.msra.mxu0 0
    %108 = vmatprep.subr.bf16.mxu0 0
    %109 = vmatpush1.bf16.msra.mxu0 0
    %110 = vmatprep.subr.bf16.mxu0 0
    %111 = vmatpush1.bf16.msra.mxu0 0
    %112 = vmatprep.subr.bf16.mxu0 0
    %113 = vmatpush1.bf16.msra.mxu0 0
    %114 = vmatprep.subr.bf16.mxu0 0
    %115 = vmatpush1.bf16.msra.mxu0 0
    %116 = vmatprep.subr.bf16.mxu0 0
    %117 = vmatpush1.bf16.msra.mxu0 0
    %118 = vmatprep.subr.bf16.mxu0 0
    %119 = vmatpush1.bf16.msra.mxu0 0
    %120 = vmatprep.subr.bf16.mxu0 0
    %121 = vmatpush1.bf16.msra.mxu0 0
    %122 = vmatprep.subr.bf16.mxu0 0
    %123 = vmatpush1.bf16.msra.mxu0 0
    %124 = vmatprep.subr.bf16.mxu0 0
    %125 = vmatpush1.bf16.msra.mxu0 0
    %126 = vmatprep.subr.bf16.mxu0 0
    %127 = vmatpush1.bf16.msra.mxu0 0
    %128 = vmatprep.subr.bf16.mxu0 0
    %129 = vmatpush1.bf16.msra.mxu0 0
    %130 = vmatprep.subr.bf16.mxu0 0
    %131 = vmatpush1.bf16.msra.mxu0 0
    %132 = vmatprep.subr.bf16.mxu0 0
    %133 = vmatpush1.bf16.msra.mxu0 0
    %134 = vmatprep.mubr.bf16.mxu0 0
    %135 = vmatmul.mubr.bf16.gmra.mrb[0].mxu0 %v100
    %v136 = vpop.f32.mrb[0].mxu0
    %v137 = vadd.f32 %v90, %v136
    %v138 = vpop.f32.mrb[0].mxu0
    %v139 = vpop.f32.mrb[0].mxu0
    %v140 = vpop.f32.mrb[0].mxu0
    %141 = vdwg.mxu0
    %v142 = vmax.f32 %v137, 0.0
    %v143 = vpack.c.bf16 %v142, %v142
    %v144 = vld [vmem:[#allocation7] sm:$0xf]
    %v145 = vld [vmem:[#allocation7 + $0x4] sm:$0xf]
    %v146 = vld [vmem:[#allocation7 + $0x8] sm:$0xf]
    %v147 = vld [vmem:[#allocation7 + $0xc] sm:$0xf]
    %v148 = vld [vmem:[#allocation7 + $0x10] sm:$0xf]
    %v149 = vld [vmem:[#allocation7 + $0x14] sm:$0xf]
    %v150 = vld [vmem:[#allocation7 + $0x18] sm:$0xf]
    %v151 = vld [vmem:[#allocation7 + $0x1c] sm:$0xf]
    %v152 = vld [vmem:[#allocation7 + $0x20] sm:$0xf]
    %v153 = vld [vmem:[#allocation7 + $0x24] sm:$0xf]
    %v154 = vld [vmem:[#allocation7 + $0x28] sm:$0xf]
    %v155 = vld [vmem:[#allocation7 + $0x2c] sm:$0xf]
    %v156 = vld [vmem:[#allocation7 + $0x30] sm:$0xf]
    %v157 = vld [vmem:[#allocation7 + $0x34] sm:$0xf]
    %v158 = vld [vmem:[#allocation7 + $0x38] sm:$0xf]
    %v159 = vld [vmem:[#allocation7 + $0x3c] sm:$0xf]
    %v160 = vld [vmem:[%s4] sm:$0x1]
    %v162 = vlaneseq
    %v163 = vshrl.u32 %v162, 7
    %v164 = vsub.s32 0, %v163
    %v165 = vrot.slane %v160, %v164
    %v183 = vunpack.c.l.b16 %v144
    %v184 = vunpack.c.l.b16 %v145
    %v185 = vunpack.c.l.b16 %v146
    %v186 = vunpack.c.l.b16 %v147
    %v187 = vunpack.c.l.b16 %v148
    %v188 = vunpack.c.l.b16 %v149
    %v189 = vunpack.c.l.b16 %v150
    %v190 = vunpack.c.l.b16 %v151
    %v191 = vunpack.c.l.b16 %v152
    %v192 = vunpack.c.l.b16 %v153
    %v193 = vunpack.c.l.b16 %v154
    %v194 = vunpack.c.l.b16 %v155
    %v195 = vunpack.c.l.b16 %v156
    %v196 = vunpack.c.l.b16 %v157
    %v197 = vunpack.c.l.b16 %v158
    %v198 = vunpack.c.l.b16 %v159
    %v199 = vpack.c.b16 %v184, %v183
    %v200 = vpack.c.b16 %v186, %v185
    %v201 = vpack.c.b16 %v188, %v187
    %v202 = vpack.c.b16 %v190, %v189
    %v203 = vpack.c.b16 %v192, %v191
    %v204 = vpack.c.b16 %v194, %v193
    %v205 = vpack.c.b16 %v196, %v195
    %v206 = vpack.c.b16 %v198, %v197
    %215 = vmatprep.subr.bf16.mxu0 0
    %216 = vmatpush1.bf16.msra.mxu0 %v199
    %217 = vmatprep.subr.bf16.mxu0 0
    %218 = vmatpush1.bf16.msra.mxu0 %v200
    %219 = vmatprep.subr.bf16.mxu0 0
    %220 = vmatpush1.bf16.msra.mxu0 %v201
    %221 = vmatprep.subr.bf16.mxu0 0
    %222 = vmatpush1.bf16.msra.mxu0 %v202
    %223 = vmatprep.subr.bf16.mxu0 0
    %224 = vmatpush1.bf16.msra.mxu0 %v203
    %225 = vmatprep.subr.bf16.mxu0 0
    %226 = vmatpush1.bf16.msra.mxu0 %v204
    %227 = vmatprep.subr.bf16.mxu0 0
    %228 = vmatpush1.bf16.msra.mxu0 %v205
    %229 = vmatprep.subr.bf16.mxu0 0
    %230 = vmatpush1.bf16.msra.mxu0 %v206
    %231 = vmatprep.subr.bf16.mxu0 0
    %232 = vmatpush1.bf16.msra.mxu0 0
    %233 = vmatprep.subr.bf16.mxu0 0
    %234 = vmatpush1.bf16.msra.mxu0 0
    %235 = vmatprep.subr.bf16.mxu0 0
    %236 = vmatpush1.bf16.msra.mxu0 0
    %237 = vmatprep.subr.bf16.mxu0 0
    %238 = vmatpush1.bf16.msra.mxu0 0
    %239 = vmatprep.subr.bf16.mxu0 0
    %240 = vmatpush1.bf16.msra.mxu0 0
    %241 = vmatprep.subr.bf16.mxu0 0
    %242 = vmatpush1.bf16.msra.mxu0 0
    %243 = vmatprep.subr.bf16.mxu0 0
    %244 = vmatpush1.bf16.msra.mxu0 0
    %245 = vmatprep.subr.bf16.mxu0 0
    %246 = vmatpush1.bf16.msra.mxu0 0
    %247 = vmatprep.mubr.bf16.mxu0 0
    %248 = vmatmul.mubr.bf16.gmra.mrb[0].mxu0 %v143
    %v249 = vpop.f32.mrb[0].mxu0
    %v250 = vadd.f32 %v165, %v249
    %v251 = vpop.f32.mrb[0].mxu0
    %v252 = vpop.f32.mrb[0].mxu0
    %v253 = vpop.f32.mrb[0].mxu0
    %254 = vdwg.mxu0
    %v255 = vmax.f32 %v250, 0.0
    %v256 = vpack.c.bf16 %v255, %v255
    %v257 = vld [vmem:[#allocation8] sm:$0xf]
    %v258 = vld [vmem:[#allocation8 + $0x4] sm:$0xf]
    %v259 = vld [vmem:[#allocation8 + $0x8] sm:$0xf]
    %v260 = vld [vmem:[#allocation8 + $0xc] sm:$0xf]
    %v261 = vld [vmem:[#allocation8 + $0x10] sm:$0xf]
    %v262 = vld [vmem:[#allocation8 + $0x14] sm:$0xf]
    %v263 = vld [vmem:[#allocation8 + $0x18] sm:$0xf]
    %v264 = vld [vmem:[#allocation8 + $0x1c] sm:$0xf]
    %v265 = vld [vmem:[#allocation8 + $0x20] sm:$0xf]
    %v266 = vld [vmem:[#allocation8 + $0x24] sm:$0xf]
    %v267 = vld [vmem:[#allocation8 + $0x28] sm:$0xf]
    %v268 = vld [vmem:[#allocation8 + $0x2c] sm:$0xf]
    %v269 = vld [vmem:[#allocation8 + $0x30] sm:$0xf]
    %v270 = vld [vmem:[#allocation8 + $0x34] sm:$0xf]
    %v271 = vld [vmem:[#allocation8 + $0x38] sm:$0xf]
    %v272 = vld [vmem:[#allocation8 + $0x3c] sm:$0xf]
    %v273 = vld [vmem:[%s6] sm:$0x1]
    %v275 = vlaneseq
    %v276 = vshrl.u32 %v275, 7
    %v277 = vsub.s32 0, %v276
    %v278 = vrot.slane %v273, %v277
    %v296 = vunpack.c.l.b16 %v257
    %v297 = vunpack.c.l.b16 %v258
    %v298 = vunpack.c.l.b16 %v259
    %v299 = vunpack.c.l.b16 %v260
    %v300 = vunpack.c.l.b16 %v261
    %v301 = vunpack.c.l.b16 %v262
    %v302 = vunpack.c.l.b16 %v263
    %v303 = vunpack.c.l.b16 %v264
    %v304 = vunpack.c.l.b16 %v265
    %v305 = vunpack.c.l.b16 %v266
    %v306 = vunpack.c.l.b16 %v267
    %v307 = vunpack.c.l.b16 %v268
    %v308 = vunpack.c.l.b16 %v269
    %v309 = vunpack.c.l.b16 %v270
    %v310 = vunpack.c.l.b16 %v271
    %v311 = vunpack.c.l.b16 %v272
    %v312 = vpack.c.b16 %v297, %v296
    %v313 = vpack.c.b16 %v299, %v298
    %v314 = vpack.c.b16 %v301, %v300
    %v315 = vpack.c.b16 %v303, %v302
    %v316 = vpack.c.b16 %v305, %v304
    %v317 = vpack.c.b16 %v307, %v306
    %v318 = vpack.c.b16 %v309, %v308
    %v319 = vpack.c.b16 %v311, %v310
    %328 = vmatprep.subr.bf16.mxu0 0
    %329 = vmatpush1.bf16.msra.mxu0 %v312
    %330 = vmatprep.subr.bf16.mxu0 0
    %331 = vmatpush1.bf16.msra.mxu0 %v313
    %332 = vmatprep.subr.bf16.mxu0 0
    %333 = vmatpush1.bf16.msra.mxu0 %v314
    %334 = vmatprep.subr.bf16.mxu0 0
    %335 = vmatpush1.bf16.msra.mxu0 %v315
    %336 = vmatprep.subr.bf16.mxu0 0
    %337 = vmatpush1.bf16.msra.mxu0 %v316
    %338 = vmatprep.subr.bf16.mxu0 0
    %339 = vmatpush1.bf16.msra.mxu0 %v317
    %340 = vmatprep.subr.bf16.mxu0 0
    %341 = vmatpush1.bf16.msra.mxu0 %v318
    %342 = vmatprep.subr.bf16.mxu0 0
    %343 = vmatpush1.bf16.msra.mxu0 %v319
    %344 = vmatprep.subr.bf16.mxu0 0
    %345 = vmatpush1.bf16.msra.mxu0 0
    %346 = vmatprep.subr.bf16.mxu0 0
    %347 = vmatpush1.bf16.msra.mxu0 0
    %348 = vmatprep.subr.bf16.mxu0 0
    %349 = vmatpush1.bf16.msra.mxu0 0
    %350 = vmatprep.subr.bf16.mxu0 0
    %351 = vmatpush1.bf16.msra.mxu0 0
    %352 = vmatprep.subr.bf16.mxu0 0
    %353 = vmatpush1.bf16.msra.mxu0 0
    %354 = vmatprep.subr.bf16.mxu0 0
    %355 = vmatpush1.bf16.msra.mxu0 0
    %356 = vmatprep.subr.bf16.mxu0 0
    %357 = vmatpush1.bf16.msra.mxu0 0
    %358 = vmatprep.subr.bf16.mxu0 0
    %359 = vmatpush1.bf16.msra.mxu0 0
    %360 = vmatprep.mubr.bf16.mxu0 0
    %361 = vmatmul.mubr.bf16.gmra.mrb[0].mxu0 %v256
    %v362 = vpop.f32.mrb[0].mxu0
    %v363 = vadd.f32 %v278, %v362
    %v364 = vpop.f32.mrb[0].mxu0
    %v365 = vpop.f32.mrb[0].mxu0
    %v366 = vpop.f32.mrb[0].mxu0
    %367 = vdwg.mxu0
    %368 = vst [vmem:[#allocation10] sm:$0xff] %v363
    // Predicated region
    $region46: #{tpu_custom_call.1} parent=1 // pred_check
      _
    $region47: #{tpu_custom_call.1} parent=1 // pred_check_branch
      %370 = sbr.rel (0) target = $region49
    $region48: #{tpu_custom_call.1} parent=1 // pred_region
      %s372 = ssub.s32 128, 128
      %373 = vsyncadd [#allocation4], %s372
      %s375 = sshll.u32 [#allocation10], 4
      %s376 = int_to_ptr.vmem [resolvable:$true] %s375
      %378 = dma.vmem_to_hbm [thread:$0]  %s376, 128, %s7, [#allocation4]
    $region49: #{tpu_custom_call.1} parent=1 // pred_fallthru
      _
    // Predicated region
    $region50: #{tpu_custom_call.1} parent=1 // pred_check
      _
    $region51: #{tpu_custom_call.1} parent=1 // pred_check_branch
      %380 = sbr.rel (0) target = $region53
    $region52: #{tpu_custom_call.1} parent=1 // pred_region
      %381 = dma.done [#allocation4], 128
    $region53: #{tpu_custom_call.1} parent=1 // pred_fallthru
      _
    %382 = vsyncpa [#allocation3], 1
    %383 = vsyncpa [#allocation6], 1
    %384 = vsyncpa [#allocation9], 1
    %385 = vsyncpa [#allocation4], 1

</llo_original>
